<compile_context>
chip_gen: v5e
topology: v5e:2x2
jax: 0.10.0
libtpu: 0.0.40
codegen_flags: <defaults>
</compile_context>

<pallas_src>
import functools

import jax
import jax.numpy as jnp
from jax.experimental import pallas as pl
from jax.experimental.pallas import tpu as pltpu


def _conv_out(n):
    """Output length of Conv2d(kernel=3, stride=2, padding=0) along one axis."""
    return (n - 3) // 2 + 1


# ----------------------------------------------------------------------------
# Fused kernel: conv1+ReLU -> conv2+ReLU -> Linear, Bb batch elements per step.
# All GEMMs are plain 2-D dots with M = mb = Bb*t1h rows.
# ----------------------------------------------------------------------------
def _subsample_kernel(xin_ref, w1_ref, b1_ref, w2_ref, b2_ref, wl_ref, bl_ref,
                      o_ref, a_scr, *, mb):
    f32 = jnp.float32
    cdt = xin_ref.dtype                      # MXU operand dtype (f32 or bf16)

    # ---- Conv1 + ReLU: one K-merged GEMM per output-time parity --------------
    # Row m = bb*t1h + j of parity slab p holds conv1 output at time t1 = 2j + p,
    # channel-major over columns (col = c*F1 + f1).
    a_f32 = jnp.maximum(
        jnp.dot(xin_ref[0], w1_ref[...], preferred_element_type=f32) + b1_ref[...],
        0.0)                                                  # even-t1 slab A
    b_slab = jnp.maximum(
        jnp.dot(xin_ref[1], w1_ref[...], preferred_element_type=f32) + b1_ref[...],
        0.0).astype(cdt)                                      # odd-t1 slab B

    # ---- stage a row-shifted view of slab A for conv2's kh=2 tap -------------
    # conv2 output row j needs conv1 times {2j, 2j+1, 2j+2} = {A[j], B[j], A[j+1]}.
    # Scratch is f32 and 8 rows taller than the slab: the single over-read row
    # (index mb) only ever lands in the discarded last output row of the block.
    cols = a_scr.shape[1]
    a_scr[0:mb, :] = a_f32
    a_scr[mb:mb + 8, :] = jnp.zeros((8, cols), f32)           # keep over-read finite
    a_slab = a_f32.astype(cdt)
    a_shift = a_scr[1:mb + 1, :].astype(cdt)                  # A[j+1]

    # ---- Conv2 + ReLU: three tap GEMMs accumulated in f32 --------------------
    acc2 = jnp.dot(a_slab, w2_ref[0], preferred_element_type=f32)
    acc2 = acc2 + jnp.dot(b_slab, w2_ref[1], preferred_element_type=f32)
    acc2 = acc2 + jnp.dot(a_shift, w2_ref[2], preferred_element_type=f32)
    y2 = jnp.maximum(acc2 + b2_ref[...], 0.0).astype(cdt)     # (mb, D*F2)

    # ---- Linear (channel-major flatten is baked into the column order) -------
    out = jnp.dot(y2, wl_ref[...], preferred_element_type=f32) + bl_ref[...]
    # TODO(synk): nn.Dropout(p=0.1) is identity in eval mode; training-mode dropout
    # would use pltpu.prng_seed / pltpu.stateful_bernoulli here.
    o_ref[...] = out.astype(o_ref.dtype)


# ----------------------------------------------------------------------------
# Trace-time weight "densification": fold the frequency taps (kw) of each conv
# into block-sparse matrices so the kernel only runs plain 2-D GEMMs.
# ----------------------------------------------------------------------------
def _densify_conv1(w1, F, F1):
    """w1 (D,1,3,3) OIHW -> (3F, D*F1); [kh*F+fin, c*F1+f1] = w1[c,0,kh,fin-2f1]."""
    D = w1.shape[0]
    kw = jnp.arange(F)[:, None] - 2 * jnp.arange(F1)[None, :]     # (F, F1)
    valid = (kw >= 0) & (kw <= 2)
    kw_c = jnp.clip(kw, 0, 2)
    mats = []
    for kh in range(3):
        g = w1[:, 0, kh, :][:, kw_c]                              # (D, F, F1)
        g = jnp.where(valid[None, :, :], g, 0.0)
        mats.append(jnp.transpose(g, (1, 0, 2)).reshape(F, D * F1))
    return jnp.concatenate(mats, axis=0)                          # (3F, D*F1)


def _densify_conv2(w2, F1, F2):
    """w2 (D,D,3,3) OIHW -> (3, D*F1, D*F2);
    out[kh, c*F1+f1, c2*F2+f2] = w2[c2, c, kh, f1-2*f2]."""
    D = w2.shape[0]
    kw = jnp.arange(F1)[:, None] - 2 * jnp.arange(F2)[None, :]    # (F1, F2)
    valid = (kw >= 0) & (kw <= 2)
    kw_c = jnp.clip(kw, 0, 2)
    mats = []
    for kh in range(3):
        g = w2[:, :, kh, :][:, :, kw_c]                           # (D, D, F1, F2)
        g = jnp.where(valid[None, None, :, :], g, 0.0)
        mats.append(jnp.transpose(g, (1, 2, 0, 3)).reshape(D * F1, D * F2))
    return jnp.stack(mats, axis=0)                                # (3, D*F1, D*F2)


# ----------------------------------------------------------------------------
# Batch-block selection: largest divisor of B whose row slab is aligned, fits
# the VMEM budget, roughly hits the MXU M-target and (if possible) leaves >=2
# grid steps so a "parallel" grid axis can feed both v7x TensorCores.
# ----------------------------------------------------------------------------
def _pick_batch_block(B, t1h, row_align, per_b_bytes, weight_bytes, vmem_budget,
                      m_target=512):
    cap_mem = max(1, int((vmem_budget - weight_bytes) // max(per_b_bytes, 1)))
    cap_m = max(1, 2 * (-(-m_target // t1h)))     # allow up to ~2x the M target
    cap = min(cap_mem, cap_m, B)
    cands = [d for d in range(1, B + 1)
             if B % d == 0 and ((d * t1h) % row_align == 0 or d == B)]
    # prefer: fits the cap, keeps >=2 grid steps, then as large as possible
    return max(cands, key=lambda d: (d <= cap, (B // d) >= 2 or B == 1, d))


# ----------------------------------------------------------------------------
# Forward pass (matches PyTorch ConvolutionSubsample.forward in eval mode)
# ----------------------------------------------------------------------------
def conv_subsample_forward(x_nchw, params, *, compute_dtype=jnp.float32):
    w1, b1, w2, b2, wl, bl = params   # w1:(D,1,3,3), w2:(D,D,3,3) OIHW; wl:(D*F2, D)
    B, Cin, T, F = x_nchw.shape
    assert Cin == 1
    D = w1.shape[0]
    T1, F1 = _conv_out(T), _conv_out(F)
    T2, F2 = _conv_out(T1), _conv_out(F1)
    assert T2 >= 1 and F2 >= 1, "input too small for two k3/s2 convs"
    assert wl.shape == (D * F2, D)
    t1h = (T1 + 1) // 2               # rows per conv1 output-time-parity slab

    # Row-validity contract tying the padding to the conv2 tap reads:
    #   * every even-parity row j < t1h is a valid conv1 output (2j <= T1-1), so the
    #     kh=0 tap (A[j], j < T2) and the kh=2 tap (A[j+1], j+1 <= T2 = t1h-1) only
    #     read valid rows and never cross a batch boundary;
    #   * the odd-parity slab's last row may come from zero padding when T1 is odd,
    #     but the kh=1 tap only reads B[j] for j < T2 = t1h-1;
    #   * output row j = t1h-1 of each batch element is therefore the only garbage
    #     row and is sliced off below.
    assert T2 == t1h - 1

    DF1, DF2 = D * F1, D * F2
    Dp = 128 if D < 128 else D        # lane-dense Linear/output N (unmasked stores)
    cdt = jnp.dtype(compute_dtype)
    csize = cdt.itemsize

    # ---- trace-time parameter prep (pure weight reshuffling, runs once) ----
    w1cat = _densify_conv1(w1.astype(jnp.float32), F, F1).astype(cdt)   # (3F, D*F1)
    w2big = _densify_conv2(w2.astype(jnp.float32), F1, F2).astype(cdt)  # (3,D*F1,D*F2)
    b1row = jnp.repeat(b1.astype(jnp.float32), F1)[None, :]             # (1, D*F1) f32
    b2row = jnp.repeat(b2.astype(jnp.float32), F2)[None, :]             # (1, D*F2) f32
    wlp = jnp.pad(wl.astype(jnp.float32), ((0, 0), (0, Dp - D))).astype(cdt)
    blp = jnp.pad(bl.astype(jnp.float32), (0, Dp - D))[None, :]         # (1, Dp)  f32

    # ---- input prep: one gather pass.  Lays the 3 conv1 time taps contiguously
    # along K and splits output-time parity, so every in-kernel read is a plain
    # contiguous 2-D slab:  xin[p, b*t1h + j, kh*F + f] = x[b, 4j + 2p + kh, f].
    x = x_nchw[:, 0].astype(cdt)                                        # (B, T, F)
    Tpad = 4 * t1h + 4
    assert Tpad >= T
    xp = jnp.pad(x, ((0, 0), (0, Tpad - T), (0, 0)))
    tap_t = (4 * jnp.arange(t1h)[:, None, None]
             + 2 * jnp.arange(2)[None, :, None]
             + jnp.arange(3)[None, None, :])                            # (t1h, 2, 3)
    xg = xp[:, tap_t, :]                                                # (B,t1h,2,3,F)
    xin = jnp.transpose(xg, (2, 0, 1, 3, 4)).reshape(2, B * t1h, 3 * F)
    # TODO(synk): fuse this tap/parity gather into the upstream producer to avoid the
    # extra HBM pass on long utterances (matters most on v5e's ~0.82 TB/s HBM).

    # ---- per-generation VMEM budget, batch-block size and VMEM limit ----
    try:
        vmem_cap = int(pltpu.get_tpu_info().vmem_capacity_bytes)
    except Exception:                       # interpret mode / older runtimes
        vmem_cap = 64 << 20                 # v7x has the smallest VMEM: be conservative
    weight_bytes = (2 * (w1cat.size + w2big.size + wlp.size) * csize    # x2: dbl-buffered
                    + 2 * 4 * (DF1 + DF2 + Dp))                         # f32 bias rows
    per_b_bytes = t1h * (2 * 2 * 3 * F * csize      # input block, double-buffered
                         + 2 * Dp * 4               # output block, double-buffered
                         + 2 * DF1 * csize          # A / B slabs (compute dtype)
                         + 3 * DF1 * 4              # f32 scratch + conv1 accumulators
                         + 2 * DF2 * 4              # conv2 accumulator + y2
                         + 2 * Dp * 4)              # linear accumulator + out
    row_align = 16 if csize == 2 else 8             # keep Mb friendly to (8,128)/packing
    Bb = _pick_batch_block(B, t1h, row_align, per_b_bytes, weight_bytes,
                           int(0.6 * vmem_cap))
    Mb = Bb * t1h
    needed = weight_bytes + Bb * per_b_bytes + 4 * (Mb + 8) * DF1
    vmem_limit = int(min(0.8 * vmem_cap, max(32 << 20, 2 * needed)))

    flops = 2 * (B * t1h) * (2 * 3 * F * DF1 + 3 * DF1 * DF2 + DF2 * Dp)
    bytes_accessed = int((xin.size + w1cat.size + w2big.size + wlp.size) * csize
                         + 4 * (b1row.size + b2row.size + blp.size + B * t1h * Dp))

    kernel = functools.partial(_subsample_kernel, mb=Mb)
    out = pl.pallas_call(
        kernel,
        out_shape=jax.ShapeDtypeStruct((B * t1h, Dp), jnp.float32),
        grid=(B // Bb,),
        in_specs=[
            pl.BlockSpec((2, Mb, 3 * F), lambda i: (0, i, 0)),   # batch-blocked input
            pl.BlockSpec((3 * F, DF1), lambda i: (0, 0)),        # resident weights
            pl.BlockSpec((1, DF1), lambda i: (0, 0)),
            pl.BlockSpec((3, DF1, DF2), lambda i: (0, 0, 0)),
            pl.BlockSpec((1, DF2), lambda i: (0, 0)),
            pl.BlockSpec((DF2, Dp), lambda i: (0, 0)),
            pl.BlockSpec((1, Dp), lambda i: (0, 0)),
        ],
        out_specs=pl.BlockSpec((Mb, Dp), lambda i: (i, 0)),      # lane-dense slab
        scratch_shapes=[pltpu.VMEM((Mb + 8, DF1), jnp.float32)],
        compiler_params=pltpu.CompilerParams(
            dimension_semantics=("parallel",),
            vmem_limit_bytes=vmem_limit),
        cost_estimate=pl.CostEstimate(
            flops=int(flops), transcendentals=0, bytes_accessed=bytes_accessed),
    )(xin, w1cat, b1row, w2big, b2row, wlp, blp)

    # Drop the one garbage time row per batch element and the lane padding.
    return out.reshape(B, t1h, Dp)[:, :T2, :D]


# ----------------------------------------------------------------------------
# Pure-JAX reference (lax conv) for verification
# ----------------------------------------------------------------------------
def _reference(x_nchw, params):
    w1, b1, w2, b2, wl, bl = params
    y = jax.lax.conv_general_dilated(x_nchw, w1, (2, 2), 'VALID',
                                     dimension_numbers=('NCHW', 'OIHW', 'NCHW'))
    y = jax.nn.relu(y + b1[None, :, None, None])
    y = jax.lax.conv_general_dilated(y, w2, (2, 2), 'VALID',
                                     dimension_numbers=('NCHW', 'OIHW', 'NCHW'))
    y = jax.nn.relu(y + b2[None, :, None, None])
    B, C, T2, F2 = y.shape
    y = jnp.transpose(y, (0, 2, 1, 3)).reshape(B, T2, C * F2)   # channel-major flatten
    return y @ wl + bl


if __name__ == "__main__":
    # Small but batch-blockable shapes: batch=16, 1 input channel, time=16,
    # freq (in_dim)=16, encoder_dim=32.  (Bb resolves to 8 -> grid of 2 steps.)
    B, T, F, D = 16, 16, 16, 32
    F2 = ((F - 1) // 2 - 1) // 2          # Linear in_features = D * F2

    key = jax.random.PRNGKey(0)
    k = jax.random.split(key, 7)
    x = jax.random.normal(k[0], (B, 1, T, F), dtype=jnp.float32)

    # Deterministic synthetic parameters (PyTorch OIHW conv weights, (K,N) linear).
    w1 = jax.random.normal(k[1], (D, 1, 3, 3), dtype=jnp.float32) * 0.2
    b1 = jax.random.normal(k[2], (D,), dtype=jnp.float32) * 0.1
    w2 = jax.random.normal(k[3], (D, D, 3, 3), dtype=jnp.float32) * 0.05
    b2 = jax.random.normal(k[4], (D,), dtype=jnp.float32) * 0.1
    wl = jax.random.normal(k[5], (D * F2, D), dtype=jnp.float32) * 0.05
    bl = jax.random.normal(k[6], (D,), dtype=jnp.float32) * 0.1
    params = (w1, b1, w2, b2, wl, bl)

    ref = jax.block_until_ready(_reference(x, params))

    # f32 path (default): must match the lax reference tightly.
    out = jax.block_until_ready(jax.jit(conv_subsample_forward)(x, params))
    assert out.shape == ref.shape, (out.shape, ref.shape)
    assert jnp.allclose(out, ref, atol=2e-4, rtol=2e-4), \
        float(jnp.max(jnp.abs(out - ref)))

    # bf16 MXU-operand path (v6e/v7x production config): f32 accumulation, loose tol.
    out_bf = jax.block_until_ready(
        jax.jit(functools.partial(conv_subsample_forward,
                                  compute_dtype=jnp.bfloat16))(x, params))
    assert out_bf.shape == ref.shape, (out_bf.shape, ref.shape)
    assert jnp.allclose(out_bf, ref, atol=5e-2, rtol=5e-2), \
        float(jnp.max(jnp.abs(out_bf - ref)))

    print("KERNEL_OK")
</pallas_src>

<mosaic_0001>
module attributes {stable_mosaic.version = 11 : i64} {
  func.func @_subsample_kernel(%arg0: i32, %arg1: memref<2x32x48xf32, #tpu.memory_space<vmem>>, %arg2: memref<48x224xf32, #tpu.memory_space<vmem>>, %arg3: memref<1x224xf32, #tpu.memory_space<vmem>>, %arg4: memref<3x224x96xf32, #tpu.memory_space<vmem>>, %arg5: memref<1x96xf32, #tpu.memory_space<vmem>>, %arg6: memref<96x128xf32, #tpu.memory_space<vmem>>, %arg7: memref<1x128xf32, #tpu.memory_space<vmem>>, %arg8: memref<32x128xf32, #tpu.memory_space<vmem>>, %arg9: memref<40x224xf32, #tpu.memory_space<vmem>>) attributes {dimension_semantics = [#tpu.dimension_semantics<parallel>], iteration_bounds = array<i64: 2>, scalar_prefetch = 0 : i64, scratch_operands = 1 : i64, tpu.core_type = #tpu.core_type<tc>, window_params = [{transform_indices = @transform_0, window_bounds = array<i64: 2, 32, 48>}, {pipeline_mode = #tpu.pipeline_mode<synchronous>, transform_indices = @transform_1, window_bounds = array<i64: 48, 224>}, {pipeline_mode = #tpu.pipeline_mode<synchronous>, transform_indices = @transform_2, window_bounds = array<i64: 1, 224>}, {pipeline_mode = #tpu.pipeline_mode<synchronous>, transform_indices = @transform_3, window_bounds = array<i64: 3, 224, 96>}, {pipeline_mode = #tpu.pipeline_mode<synchronous>, transform_indices = @transform_4, window_bounds = array<i64: 1, 96>}, {pipeline_mode = #tpu.pipeline_mode<synchronous>, transform_indices = @transform_5, window_bounds = array<i64: 96, 128>}, {pipeline_mode = #tpu.pipeline_mode<synchronous>, transform_indices = @transform_6, window_bounds = array<i64: 1, 128>}, {transform_indices = @transform_7, window_bounds = array<i64: 32, 128>}]} {
    %c0 = arith.constant 0 : index
    %c0_0 = arith.constant 0 : index
    %c0_1 = arith.constant 0 : index
    %0 = vector.load %arg1[%c0, %c0_0, %c0_1] : memref<2x32x48xf32, #tpu.memory_space<vmem>>, vector<1x32x48xf32>
    %1 = vector.shape_cast %0 : vector<1x32x48xf32> to vector<32x48xf32>
    %c0_2 = arith.constant 0 : index
    %c0_3 = arith.constant 0 : index
    %2 = vector.load %arg2[%c0_2, %c0_3] : memref<48x224xf32, #tpu.memory_space<vmem>>, vector<48x224xf32>
    %cst = arith.constant dense<0.000000e+00> : vector<32x224xf32>
    %3 = tpu.matmul %1, %2, %cst {dimension_numbers = #tpu.dot_dimension_numbers<[1], [0], [0], [1], [0, 0, 1, 1], [], []>} : vector<32x48xf32>, vector<48x224xf32>, vector<32x224xf32> -> vector<32x224xf32>
    %c0_4 = arith.constant 0 : index
    %c0_5 = arith.constant 0 : index
    %4 = vector.load %arg3[%c0_4, %c0_5] : memref<1x224xf32, #tpu.memory_space<vmem>>, vector<1x224xf32>
    %5 = vector.broadcast %4 : vector<1x224xf32> to vector<32x224xf32>
    %6 = arith.addf %3, %5 : vector<32x224xf32>
    %cst_6 = arith.constant 0.000000e+00 : f32
    %7 = vector.broadcast %cst_6 : f32 to vector<32x224xf32>
    %8 = arith.maximumf %6, %7 : vector<32x224xf32>
    %c1 = arith.constant 1 : index
    %c0_7 = arith.constant 0 : index
    %c0_8 = arith.constant 0 : index
    %9 = vector.load %arg1[%c1, %c0_7, %c0_8] : memref<2x32x48xf32, #tpu.memory_space<vmem>>, vector<1x32x48xf32>
    %10 = vector.shape_cast %9 : vector<1x32x48xf32> to vector<32x48xf32>
    %c0_9 = arith.constant 0 : index
    %c0_10 = arith.constant 0 : index
    %11 = vector.load %arg2[%c0_9, %c0_10] : memref<48x224xf32, #tpu.memory_space<vmem>>, vector<48x224xf32>
    %cst_11 = arith.constant dense<0.000000e+00> : vector<32x224xf32>
    %12 = tpu.matmul %10, %11, %cst_11 {dimension_numbers = #tpu.dot_dimension_numbers<[1], [0], [0], [1], [0, 0, 1, 1], [], []>} : vector<32x48xf32>, vector<48x224xf32>, vector<32x224xf32> -> vector<32x224xf32>
    %c0_12 = arith.constant 0 : index
    %c0_13 = arith.constant 0 : index
    %13 = vector.load %arg3[%c0_12, %c0_13] : memref<1x224xf32, #tpu.memory_space<vmem>>, vector<1x224xf32>
    %14 = vector.broadcast %13 : vector<1x224xf32> to vector<32x224xf32>
    %15 = arith.addf %12, %14 : vector<32x224xf32>
    %cst_14 = arith.constant 0.000000e+00 : f32
    %16 = vector.broadcast %cst_14 : f32 to vector<32x224xf32>
    %17 = arith.maximumf %15, %16 : vector<32x224xf32>
    %c0_15 = arith.constant 0 : index
    %c0_16 = arith.constant 0 : index
    %18 = vector.load %arg9[%c0_15, %c0_16] : memref<40x224xf32, #tpu.memory_space<vmem>>, vector<32x224xf32>
    tpu.vector_store %arg9[%c0_15, %c0_16], %8 {strides = array<i32>} : memref<40x224xf32, #tpu.memory_space<vmem>>, vector<32x224xf32>,
    %cst_17 = arith.constant 0.000000e+00 : f32
    %19 = vector.broadcast %cst_17 : f32 to vector<8x224xf32>
    %c32 = arith.constant 32 : index
    %c0_18 = arith.constant 0 : index
    %20 = vector.load %arg9[%c32, %c0_18] : memref<40x224xf32, #tpu.memory_space<vmem>>, vector<8x224xf32>
    tpu.vector_store %arg9[%c32, %c0_18], %19 {strides = array<i32>} : memref<40x224xf32, #tpu.memory_space<vmem>>, vector<8x224xf32>,
    %c1_19 = arith.constant 1 : index
    %c0_20 = arith.constant 0 : index
    %21 = vector.load %arg9[%c1_19, %c0_20] : memref<40x224xf32, #tpu.memory_space<vmem>>, vector<32x224xf32>
    %c0_21 = arith.constant 0 : index
    %c0_22 = arith.constant 0 : index
    %c0_23 = arith.constant 0 : index
    %22 = vector.load %arg4[%c0_21, %c0_22, %c0_23] : memref<3x224x96xf32, #tpu.memory_space<vmem>>, vector<1x224x96xf32>
    %23 = vector.shape_cast %22 : vector<1x224x96xf32> to vector<224x96xf32>
    %cst_24 = arith.constant dense<0.000000e+00> : vector<32x96xf32>
    %24 = tpu.matmul %8, %23, %cst_24 {dimension_numbers = #tpu.dot_dimension_numbers<[1], [0], [0], [1], [0, 0, 1, 1], [], []>} : vector<32x224xf32>, vector<224x96xf32>, vector<32x96xf32> -> vector<32x96xf32>
    %c1_25 = arith.constant 1 : index
    %c0_26 = arith.constant 0 : index
    %c0_27 = arith.constant 0 : index
    %25 = vector.load %arg4[%c1_25, %c0_26, %c0_27] : memref<3x224x96xf32, #tpu.memory_space<vmem>>, vector<1x224x96xf32>
    %26 = vector.shape_cast %25 : vector<1x224x96xf32> to vector<224x96xf32>
    %cst_28 = arith.constant dense<0.000000e+00> : vector<32x96xf32>
    %27 = tpu.matmul %17, %26, %cst_28 {dimension_numbers = #tpu.dot_dimension_numbers<[1], [0], [0], [1], [0, 0, 1, 1], [], []>} : vector<32x224xf32>, vector<224x96xf32>, vector<32x96xf32> -> vector<32x96xf32>
    %28 = arith.addf %24, %27 : vector<32x96xf32>
    %c2 = arith.constant 2 : index
    %c0_29 = arith.constant 0 : index
    %c0_30 = arith.constant 0 : index
    %29 = vector.load %arg4[%c2, %c0_29, %c0_30] : memref<3x224x96xf32, #tpu.memory_space<vmem>>, vector<1x224x96xf32>
    %30 = vector.shape_cast %29 : vector<1x224x96xf32> to vector<224x96xf32>
    %cst_31 = arith.constant dense<0.000000e+00> : vector<32x96xf32>
    %31 = tpu.matmul %21, %30, %cst_31 {dimension_numbers = #tpu.dot_dimension_numbers<[1], [0], [0], [1], [0, 0, 1, 1], [], []>} : vector<32x224xf32>, vector<224x96xf32>, vector<32x96xf32> -> vector<32x96xf32>
    %32 = arith.addf %28, %31 : vector<32x96xf32>
    %c0_32 = arith.constant 0 : index
    %c0_33 = arith.constant 0 : index
    %33 = vector.load %arg5[%c0_32, %c0_33] : memref<1x96xf32, #tpu.memory_space<vmem>>, vector<1x96xf32>
    %34 = vector.broadcast %33 : vector<1x96xf32> to vector<32x96xf32>
    %35 = arith.addf %32, %34 : vector<32x96xf32>
    %cst_34 = arith.constant 0.000000e+00 : f32
    %36 = vector.broadcast %cst_34 : f32 to vector<32x96xf32>
    %37 = arith.maximumf %35, %36 : vector<32x96xf32>
    %c0_35 = arith.constant 0 : index
    %c0_36 = arith.constant 0 : index
    %38 = vector.load %arg6[%c0_35, %c0_36] : memref<96x128xf32, #tpu.memory_space<vmem>>, vector<96x128xf32>
    %cst_37 = arith.constant dense<0.000000e+00> : vector<32x128xf32>
    %39 = tpu.matmul %37, %38, %cst_37 {dimension_numbers = #tpu.dot_dimension_numbers<[1], [0], [0], [1], [0, 0, 1, 1], [], []>} : vector<32x96xf32>, vector<96x128xf32>, vector<32x128xf32> -> vector<32x128xf32>
    %c0_38 = arith.constant 0 : index
    %c0_39 = arith.constant 0 : index
    %40 = vector.load %arg7[%c0_38, %c0_39] : memref<1x128xf32, #tpu.memory_space<vmem>>, vector<1x128xf32>
    %41 = vector.broadcast %40 : vector<1x128xf32> to vector<32x128xf32>
    %42 = arith.addf %39, %41 : vector<32x128xf32>
    %c0_40 = arith.constant 0 : index
    %c0_41 = arith.constant 0 : index
    %43 = vector.load %arg8[%c0_40, %c0_41] : memref<32x128xf32, #tpu.memory_space<vmem>>, vector<32x128xf32>
    tpu.vector_store %arg8[%c0_40, %c0_41], %42 {strides = array<i32>} : memref<32x128xf32, #tpu.memory_space<vmem>>, vector<32x128xf32>,
    return
  }
  func.func @transform_0(%arg0: i32) -> (i32, i32, i32) {
    %c0_i32 = arith.constant 0 : i32
    %c0_i32_0 = arith.constant 0 : i32
    %c0_i32_1 = arith.constant 0 : i32
    return %c0_i32, %arg0, %c0_i32_0 : i32, i32, i32
  }
  func.func @transform_1(%arg0: i32) -> (i32, i32) {
    %c0_i32 = arith.constant 0 : i32
    %c0_i32_0 = arith.constant 0 : i32
    %c0_i32_1 = arith.constant 0 : i32
    return %c0_i32, %c0_i32_0 : i32, i32
  }
  func.func @transform_2(%arg0: i32) -> (i32, i32) {
    %c0_i32 = arith.constant 0 : i32
    %c0_i32_0 = arith.constant 0 : i32
    %c0_i32_1 = arith.constant 0 : i32
    return %c0_i32, %c0_i32_0 : i32, i32
  }
  func.func @transform_3(%arg0: i32) -> (i32, i32, i32) {
    %c0_i32 = arith.constant 0 : i32
    %c0_i32_0 = arith.constant 0 : i32
    %c0_i32_1 = arith.constant 0 : i32
    %c0_i32_2 = arith.constant 0 : i32
    return %c0_i32, %c0_i32_0, %c0_i32_1 : i32, i32, i32
  }
  func.func @transform_4(%arg0: i32) -> (i32, i32) {
    %c0_i32 = arith.constant 0 : i32
    %c0_i32_0 = arith.constant 0 : i32
    %c0_i32_1 = arith.constant 0 : i32
    return %c0_i32, %c0_i32_0 : i32, i32
  }
  func.func @transform_5(%arg0: i32) -> (i32, i32) {
    %c0_i32 = arith.constant 0 : i32
    %c0_i32_0 = arith.constant 0 : i32
    %c0_i32_1 = arith.constant 0 : i32
    return %c0_i32, %c0_i32_0 : i32, i32
  }
  func.func @transform_6(%arg0: i32) -> (i32, i32) {
    %c0_i32 = arith.constant 0 : i32
    %c0_i32_0 = arith.constant 0 : i32
    %c0_i32_1 = arith.constant 0 : i32
    return %c0_i32, %c0_i32_0 : i32, i32
  }
  func.func @transform_7(%arg0: i32) -> (i32, i32) {
    %c0_i32 = arith.constant 0 : i32
    %c0_i32_0 = arith.constant 0 : i32
    return %arg0, %c0_i32 : i32, i32
  }
}

</mosaic_0001>

<llo_original>
// kernel: conv_subsample_forward.1
$region0: #{conv_subsample_forward.1}
  #allocation0 [shape = 'u32[]', space=smem, size = 0x4, offset = 0x4, fixed_abs, tag = 'smem constant byte address 0x4 - core index']
  #allocation1 [shape = 'u32[72,128]{1,0:T(1,128)}', space=vmem, size = 0x9000, scoped, tag = 'internal scratch']
  #allocation2 [shape = 'f32[40,224]{1,0:T(8,128)}', space=vmem, size = 0xa000, scoped, tag = 'scratch operand']
  %s0 = inlined_call_operand.vmem [shape: f32[2,64,48], index: 0, kind: input, shape index: {}]
  %s1 = inlined_call_operand.vmem [shape: f32[48,224], index: 1, kind: input, shape index: {}]
  %s2 = inlined_call_operand.vmem [shape: f32[1,224], index: 2, kind: input, shape index: {}]
  %s3 = inlined_call_operand.vmem [shape: f32[3,224,96], index: 3, kind: input, shape index: {}]
  %s4 = inlined_call_operand.vmem [shape: f32[1,96], index: 4, kind: input, shape index: {}]
  %s5 = inlined_call_operand.vmem [shape: f32[96,128], index: 5, kind: input, shape index: {}]
  %s6 = inlined_call_operand.vmem [shape: f32[1,128], index: 6, kind: input, shape index: {}]
  %s7 = inlined_call_operand.vmem [shape: f32[64,128], index: 7, kind: output, shape index: {}]
  %s8 = sld [smem:[#allocation0]]
  $region99: #{conv_subsample_forward.1} parent=0
    _
  %s10 = ssub.s32 1, %s8
  %s11 = scalar_select 0, %s10, %s8
  $region1: #{conv_subsample_forward.1} parent=0
    #allocation3 [shape = 'u8[65536]{0}', space=vmem, size = 0x10000, scoped, tag = 'input window, operand 0']
    loop: start=0, step=1, limit=4
    $region2: #{conv_subsample_forward.1} parent=1 // loop_pre_header
      _
    $region3: #{conv_subsample_forward.1} parent=1 // loop_header
      %s13 = sphi 0, %s17
      %p14 = scmp.ge.s32.totalorder %s13, 4
      %s23 = sphi 0, %s25
      %s26 = sphi 0, %s23
      %s27 = sphi 0, %s26
      %s43 = sphi 0, %s27
      %s47 = sphi 0, %s47
      %s49 = sphi 0, %s47
      %s50 = sphi 0, %s49
      %s64 = sphi 0, %s50
      %s68 = sphi 0, %s68
      %s70 = sphi 0, %s68
      %s71 = sphi 0, %s70
      %s85 = sphi 0, %s71
      %s89 = sphi 0, %s89
      %s91 = sphi 0, %s89
      %s92 = sphi 0, %s91
      %s106 = sphi 0, %s92
      %s110 = sphi 0, %s110
      %s112 = sphi 0, %s110
      %s113 = sphi 0, %s112
      %s127 = sphi 0, %s113
      %s131 = sphi 0, %s131
      %s133 = sphi 0, %s131
      %s134 = sphi 0, %s133
      %s148 = sphi 0, %s134
      %s152 = sphi 0, %s152
      %s154 = sphi 0, %s152
      %s155 = sphi 0, %s154
      %s169 = sphi 0, %s155
      %s175 = sphi 0, %s177
      %s178 = sphi 0, %s175
      %s179 = sphi 0, %s178
      %s195 = sphi 0, %s179
    $region4: #{conv_subsample_forward.1} parent=1 // loop_header_branch
      %16 = sbr.rel (%p14) target = $region8
    $region5: #{conv_subsample_forward.1} parent=1 // loop_body
      %s18 = ssub.s32 %s13, 1
      %s19 = ssub.s32 %s13, 2
      %s20 = sadd.s32 %s13, 1
      %s21 = ssub.s32 %s13, %s20
      %p22 = scmp.eq.s32.totalorder %s21, 0
      %s24 = sadd.s32 %s23, 1
      %s25 = scalar_select %p22, %s23, %s24
      %p28 = pneg %p22
      %p29 = scmp.eq.s32.totalorder %s13, 1
      %p30 = por %p28, %p29
      %p31 = scmp.ne.s32.totalorder %s23, %s26
      %p32 = scmp.eq.s32.totalorder %s13, 0
      %p33 = por %p31, %p32
      %p34 = scmp.ne.s32.totalorder %s23, %s26
      %p35 = scmp.eq.s32.totalorder %s18, 1
      %p36 = por %p34, %p35
      %p37 = scmp.ne.s32.totalorder %s26, %s27
      %p38 = scmp.eq.s32.totalorder %s18, 0
      %p39 = por %p37, %p38
      %p40 = scmp.ne.s32.totalorder %s26, %s27
      %p41 = scmp.eq.s32.totalorder %s19, 1
      %p42 = por %p40, %p41
      %p44 = scmp.ne.s32.totalorder %s27, %s43
      %p45 = scmp.eq.s32.totalorder %s19, 0
      %p46 = por %p44, %p45
      %s48 = sadd.s32 %s47, 1
      %p51 = scmp.eq.s32.totalorder %s13, 1
      %p52 = scmp.ne.s32.totalorder %s47, %s49
      %p53 = scmp.eq.s32.totalorder %s13, 0
      %p54 = por %p52, %p53
      %p55 = scmp.ne.s32.totalorder %s47, %s49
      %p56 = scmp.eq.s32.totalorder %s18, 1
      %p57 = por %p55, %p56
      %p58 = scmp.ne.s32.totalorder %s49, %s50
      %p59 = scmp.eq.s32.totalorder %s18, 0
      %p60 = por %p58, %p59
      %p61 = scmp.ne.s32.totalorder %s49, %s50
      %p62 = scmp.eq.s32.totalorder %s19, 1
      %p63 = por %p61, %p62
      %p65 = scmp.ne.s32.totalorder %s50, %s64
      %p66 = scmp.eq.s32.totalorder %s19, 0
      %p67 = por %p65, %p66
      %s69 = sadd.s32 %s68, 1
      %p72 = scmp.eq.s32.totalorder %s13, 1
      %p73 = scmp.ne.s32.totalorder %s68, %s70
      %p74 = scmp.eq.s32.totalorder %s13, 0
      %p75 = por %p73, %p74
      %p76 = scmp.ne.s32.totalorder %s68, %s70
      %p77 = scmp.eq.s32.totalorder %s18, 1
      %p78 = por %p76, %p77
      %p79 = scmp.ne.s32.totalorder %s70, %s71
      %p80 = scmp.eq.s32.totalorder %s18, 0
      %p81 = por %p79, %p80
      %p82 = scmp.ne.s32.totalorder %s70, %s71
      %p83 = scmp.eq.s32.totalorder %s19, 1
      %p84 = por %p82, %p83
      %p86 = scmp.ne.s32.totalorder %s71, %s85
      %p87 = scmp.eq.s32.totalorder %s19, 0
      %p88 = por %p86, %p87
      %s90 = sadd.s32 %s89, 1
      %p93 = scmp.eq.s32.totalorder %s13, 1
      %p94 = scmp.ne.s32.totalorder %s89, %s91
      %p95 = scmp.eq.s32.totalorder %s13, 0
      %p96 = por %p94, %p95
      %p97 = scmp.ne.s32.totalorder %s89, %s91
      %p98 = scmp.eq.s32.totalorder %s18, 1
      %p99 = por %p97, %p98
      %p100 = scmp.ne.s32.totalorder %s91, %s92
      %p101 = scmp.eq.s32.totalorder %s18, 0
      %p102 = por %p100, %p101
      %p103 = scmp.ne.s32.totalorder %s91, %s92
      %p104 = scmp.eq.s32.totalorder %s19, 1
      %p105 = por %p103, %p104
      %p107 = scmp.ne.s32.totalorder %s92, %s106
      %p108 = scmp.eq.s32.totalorder %s19, 0
      %p109 = por %p107, %p108
      %s111 = sadd.s32 %s110, 1
      %p114 = scmp.eq.s32.totalorder %s13, 1
      %p115 = scmp.ne.s32.totalorder %s110, %s112
      %p116 = scmp.eq.s32.totalorder %s13, 0
      %p117 = por %p115, %p116
      %p118 = scmp.ne.s32.totalorder %s110, %s112
      %p119 = scmp.eq.s32.totalorder %s18, 1
      %p120 = por %p118, %p119
      %p121 = scmp.ne.s32.totalorder %s112, %s113
      %p122 = scmp.eq.s32.totalorder %s18, 0
      %p123 = por %p121, %p122
      %p124 = scmp.ne.s32.totalorder %s112, %s113
      %p125 = scmp.eq.s32.totalorder %s19, 1
      %p126 = por %p124, %p125
      %p128 = scmp.ne.s32.totalorder %s113, %s127
      %p129 = scmp.eq.s32.totalorder %s19, 0
      %p130 = por %p128, %p129
      %s132 = sadd.s32 %s131, 1
      %p135 = scmp.eq.s32.totalorder %s13, 1
      %p136 = scmp.ne.s32.totalorder %s131, %s133
      %p137 = scmp.eq.s32.totalorder %s13, 0
      %p138 = por %p136, %p137
      %p139 = scmp.ne.s32.totalorder %s131, %s133
      %p140 = scmp.eq.s32.totalorder %s18, 1
      %p141 = por %p139, %p140
      %p142 = scmp.ne.s32.totalorder %s133, %s134
      %p143 = scmp.eq.s32.totalorder %s18, 0
      %p144 = por %p142, %p143
      %p145 = scmp.ne.s32.totalorder %s133, %s134
      %p146 = scmp.eq.s32.totalorder %s19, 1
      %p147 = por %p145, %p146
      %p149 = scmp.ne.s32.totalorder %s134, %s148
      %p150 = scmp.eq.s32.totalorder %s19, 0
      %p151 = por %p149, %p150
      %s153 = sadd.s32 %s152, 1
      %p156 = scmp.eq.s32.totalorder %s13, 1
      %p157 = scmp.ne.s32.totalorder %s152, %s154
      %p158 = scmp.eq.s32.totalorder %s13, 0
      %p159 = por %p157, %p158
      %p160 = scmp.ne.s32.totalorder %s152, %s154
      %p161 = scmp.eq.s32.totalorder %s18, 1
      %p162 = por %p160, %p161
      %p163 = scmp.ne.s32.totalorder %s154, %s155
      %p164 = scmp.eq.s32.totalorder %s18, 0
      %p165 = por %p163, %p164
      %p166 = scmp.ne.s32.totalorder %s154, %s155
      %p167 = scmp.eq.s32.totalorder %s19, 1
      %p168 = por %p166, %p167
      %p170 = scmp.ne.s32.totalorder %s155, %s169
      %p171 = scmp.eq.s32.totalorder %s19, 0
      %p172 = por %p170, %p171
      %s173 = ssub.s32 %s13, %s20
      %p174 = scmp.eq.s32.totalorder %s173, 0
      %s176 = sadd.s32 %s175, 1
      %s177 = scalar_select %p174, %s175, %s176
      %p180 = pneg %p174
      %p181 = scmp.eq.s32.totalorder %s13, 1
      %p182 = por %p180, %p181
      %p183 = scmp.ne.s32.totalorder %s175, %s178
      %p184 = scmp.eq.s32.totalorder %s13, 0
      %p185 = por %p183, %p184
      %p186 = scmp.ne.s32.totalorder %s175, %s178
      %p187 = scmp.eq.s32.totalorder %s18, 1
      %p188 = por %p186, %p187
      %p189 = scmp.ne.s32.totalorder %s178, %s179
      %p190 = scmp.eq.s32.totalorder %s18, 0
      %p191 = por %p189, %p190
      %p192 = scmp.ne.s32.totalorder %s178, %s179
      %p193 = scmp.eq.s32.totalorder %s19, 1
      %p194 = por %p192, %p193
      %p196 = scmp.ne.s32.totalorder %s179, %s195
      %p197 = scmp.eq.s32.totalorder %s19, 0
      %p198 = por %p196, %p197
      %p199 = scmp.le.s32.totalorder 1, %s13
      %p200 = scmp.lt.s32.totalorder %s13, 3
      %p201 = pnand %p199, %p200
      %p202 = pneg %p201
      // Predicated region
      $region9: #{conv_subsample_forward.1} parent=5 // pred_check
        _
      $region10: #{conv_subsample_forward.1} parent=5 // pred_check_branch
        %204 = sbr.rel (%p201) target = $region12
      $region11: #{conv_subsample_forward.1} parent=5 // pred_region
        %s205 = ssub.s32 %s13, 1
        // Predicated region
        $region13: #{conv_subsample_forward.1} parent=11 // pred_check
          %p206 = pneg %p60
        $region14: #{conv_subsample_forward.1} parent=11 // pred_check_branch
          %208 = sbr.rel (%p206) target = $region16
        $region15: #{conv_subsample_forward.1} parent=11 // pred_region
          _
        $region16: #{conv_subsample_forward.1} parent=11 // pred_fallthru
          _
        // Predicated region
        $region17: #{conv_subsample_forward.1} parent=11 // pred_check
          %p209 = pneg %p81
        $region18: #{conv_subsample_forward.1} parent=11 // pred_check_branch
          %211 = sbr.rel (%p209) target = $region20
        $region19: #{conv_subsample_forward.1} parent=11 // pred_region
          _
        $region20: #{conv_subsample_forward.1} parent=11 // pred_fallthru
          _
        // Predicated region
        $region21: #{conv_subsample_forward.1} parent=11 // pred_check
          %p212 = pneg %p102
        $region22: #{conv_subsample_forward.1} parent=11 // pred_check_branch
          %214 = sbr.rel (%p212) target = $region24
        $region23: #{conv_subsample_forward.1} parent=11 // pred_region
          _
        $region24: #{conv_subsample_forward.1} parent=11 // pred_fallthru
          _
        // Predicated region
        $region25: #{conv_subsample_forward.1} parent=11 // pred_check
          %p215 = pneg %p123
        $region26: #{conv_subsample_forward.1} parent=11 // pred_check_branch
          %217 = sbr.rel (%p215) target = $region28
        $region27: #{conv_subsample_forward.1} parent=11 // pred_region
          _
        $region28: #{conv_subsample_forward.1} parent=11 // pred_fallthru
          _
        // Predicated region
        $region29: #{conv_subsample_forward.1} parent=11 // pred_check
          %p218 = pneg %p144
        $region30: #{conv_subsample_forward.1} parent=11 // pred_check_branch
          %220 = sbr.rel (%p218) target = $region32
        $region31: #{conv_subsample_forward.1} parent=11 // pred_region
          _
        $region32: #{conv_subsample_forward.1} parent=11 // pred_fallthru
          _
        // Predicated region
        $region33: #{conv_subsample_forward.1} parent=11 // pred_check
          %p221 = pneg %p165
        $region34: #{conv_subsample_forward.1} parent=11 // pred_check_branch
          %223 = sbr.rel (%p221) target = $region36
        $region35: #{conv_subsample_forward.1} parent=11 // pred_region
          _
        $region36: #{conv_subsample_forward.1} parent=11 // pred_fallthru
          _
      $region12: #{conv_subsample_forward.1} parent=5 // pred_fallthru
        _
      %p224 = scmp.lt.s32.totalorder %s13, 2
      // Predicated region
      $region37: #{conv_subsample_forward.1} parent=5 // pred_check
        %p225 = pneg %p224
      $region38: #{conv_subsample_forward.1} parent=5 // pred_check_branch
        %227 = sbr.rel (%p225) target = $region40
      $region39: #{conv_subsample_forward.1} parent=5 // pred_region
        // Predicated region
        $region41: #{conv_subsample_forward.1} parent=39 // pred_check
          %p228 = pneg %p33
        $region42: #{conv_subsample_forward.1} parent=39 // pred_check_branch
          %230 = sbr.rel (%p228) target = $region44
        $region43: #{conv_subsample_forward.1} parent=39 // pred_region
          %s231 = sand.u32 %s23, 1
          %s232 = sand.u32 %s23, 1
          %s233 = smul.addr %s232, 64
          %s234 = scalar_lea.vmem [#allocation3], %s233
          %s235 = smul.u32 4, %s13
          %s236 = smul.addr %s235, 8
          %s237 = scalar_lea.vmem %s0, %s236
          // Predicated region
          $region45: #{conv_subsample_forward.1} parent=43 // pred_check
            _
          $region46: #{conv_subsample_forward.1} parent=43 // pred_check_branch
            %239 = sbr.rel (0) target = $region48
          $region47: #{conv_subsample_forward.1} parent=43 // pred_region
            // Predicated region
            $region49: #{conv_subsample_forward.1} parent=47 // pred_check
              _
            $region50: #{conv_subsample_forward.1} parent=47 // pred_check_branch
              %241 = sbr.rel (0) target = $region52
            $region51: #{conv_subsample_forward.1} parent=47 // pred_region
              // Predicated region
              $region64: #{conv_subsample_forward.1} parent=51 // pred_check
                _
              $region65: #{conv_subsample_forward.1} parent=51 // pred_check_branch
                %271 = sbr.rel (0) target = $region67
              $region66: #{conv_subsample_forward.1} parent=51 // pred_region
                loop: start=0, step=1, limit=1
                $region68: #{conv_subsample_forward.1} parent=66 // loop_pre_header
                  _
                $region69: #{conv_subsample_forward.1} parent=66 // loop_header
                  %s273 = sphi 0, %s277
                  %p274 = scmp.ge.s32.totalorder %s273, 1
                  %s278 = sphi %s237, %s237
                  %s279 = sphi %s234, %s234
                $region70: #{conv_subsample_forward.1} parent=66 // loop_header_branch
                  %276 = sbr.rel (%p274) target = $region74
                $region71: #{conv_subsample_forward.1} parent=66 // loop_body
                  %v280 = vld [vmem:[%s278] sm:$0xff]
                  %281 = vst [vmem:[%s279] sm:$0xff] %v280
                  %v282 = vld [vmem:[%s278 + $0x8] sm:$0xff]
                  %283 = vst [vmem:[%s279 + $0x8] sm:$0xff] %v282
                  %v284 = vld [vmem:[%s278 + $0x10] sm:$0xff]
                  %285 = vst [vmem:[%s279 + $0x10] sm:$0xff] %v284
                  %v286 = vld [vmem:[%s278 + $0x18] sm:$0xff]
                  %287 = vst [vmem:[%s279 + $0x18] sm:$0xff] %v286
                  %v288 = vld [vmem:[%s278 + $0x40] sm:$0xff]
                  %289 = vst [vmem:[%s279 + $0x20] sm:$0xff] %v288
                  %v290 = vld [vmem:[%s278 + $0x48] sm:$0xff]
                  %291 = vst [vmem:[%s279 + $0x28] sm:$0xff] %v290
                  %v292 = vld [vmem:[%s278 + $0x50] sm:$0xff]
                  %293 = vst [vmem:[%s279 + $0x30] sm:$0xff] %v292
                  %v294 = vld [vmem:[%s278 + $0x58] sm:$0xff]
                  %295 = vst [vmem:[%s279 + $0x38] sm:$0xff] %v294
                $region72: #{conv_subsample_forward.1} parent=66 // loop_footer
                  %s277 = sadd.s32 1, %s273
                $region73: #{conv_subsample_forward.1} parent=66 // loop_footer_branch
                  %272 = sbr.rel target = $region69
                $region74: #{conv_subsample_forward.1} parent=66 // loop_exit
                  _
              $region67: #{conv_subsample_forward.1} parent=51 // pred_fallthru
                _
              // Predicated region
              $region75: #{conv_subsample_forward.1} parent=51 // pred_check
                _
              $region76: #{conv_subsample_forward.1} parent=51 // pred_check_branch
                %297 = sbr.rel target = $region78
              $region77: #{conv_subsample_forward.1} parent=51 // pred_region
                _
              $region78: #{conv_subsample_forward.1} parent=51 // pred_fallthru
                _
            $region52: #{conv_subsample_forward.1} parent=47 // pred_fallthru
              _
            // Predicated region
            $region53: #{conv_subsample_forward.1} parent=47 // pred_check
              _
            $region54: #{conv_subsample_forward.1} parent=47 // pred_check_branch
              %243 = sbr.rel target = $region56
            $region55: #{conv_subsample_forward.1} parent=47 // pred_region
              %s245 = ssub.s32 256, 1
              loop: start=0, step=1, limit=1
              $region57: #{conv_subsample_forward.1} parent=55 // loop_pre_header
                _
              $region58: #{conv_subsample_forward.1} parent=55 // loop_header
                %s247 = sphi 0, %s251
                %p248 = scmp.ge.s32.totalorder %s247, 1
                %s252 = sphi %s237, %s237
                %s253 = sphi %s234, %s234
              $region59: #{conv_subsample_forward.1} parent=55 // loop_header_branch
                %250 = sbr.rel (%p248) target = $region63
              $region60: #{conv_subsample_forward.1} parent=55 // loop_body
                %v254 = vld [vmem:[%s252] sm:%s245]
                %255 = vst [vmem:[%s253] sm:%s245] %v254
                %v256 = vld [vmem:[%s252 + $0x8] sm:%s245]
                %257 = vst [vmem:[%s253 + $0x8] sm:%s245] %v256
                %v258 = vld [vmem:[%s252 + $0x10] sm:%s245]
                %259 = vst [vmem:[%s253 + $0x10] sm:%s245] %v258
                %v260 = vld [vmem:[%s252 + $0x18] sm:%s245]
                %261 = vst [vmem:[%s253 + $0x18] sm:%s245] %v260
                %v262 = vld [vmem:[%s252 + $0x40] sm:%s245]
                %263 = vst [vmem:[%s253 + $0x20] sm:%s245] %v262
                %v264 = vld [vmem:[%s252 + $0x48] sm:%s245]
                %265 = vst [vmem:[%s253 + $0x28] sm:%s245] %v264
                %v266 = vld [vmem:[%s252 + $0x50] sm:%s245]
                %267 = vst [vmem:[%s253 + $0x30] sm:%s245] %v266
                %v268 = vld [vmem:[%s252 + $0x58] sm:%s245]
                %269 = vst [vmem:[%s253 + $0x38] sm:%s245] %v268
              $region61: #{conv_subsample_forward.1} parent=55 // loop_footer
                %s251 = sadd.s32 1, %s247
              $region62: #{conv_subsample_forward.1} parent=55 // loop_footer_branch
                %246 = sbr.rel target = $region58
              $region63: #{conv_subsample_forward.1} parent=55 // loop_exit
                _
            $region56: #{conv_subsample_forward.1} parent=47 // pred_fallthru
              _
          $region48: #{conv_subsample_forward.1} parent=43 // pred_fallthru
            _
          %298 = vnop
        $region44: #{conv_subsample_forward.1} parent=39 // pred_fallthru
          _
      $region40: #{conv_subsample_forward.1} parent=5 // pred_fallthru
        _
      %p299 = scmp.le.s32.totalorder 1, %s13
      %p300 = scmp.lt.s32.totalorder %s13, 3
      %p301 = pnand %p299, %p300
      %p302 = pneg %p301
      // Predicated region
      $region79: #{conv_subsample_forward.1} parent=5 // pred_check
        _
      $region80: #{conv_subsample_forward.1} parent=5 // pred_check_branch
        %304 = sbr.rel (%p301) target = $region82
      $region81: #{conv_subsample_forward.1} parent=5 // pred_region
        %s305 = ssub.s32 %s13, 1
        %s306 = sand.u32 %s26, 1
        %s307 = sand.u32 %s26, 1
        %s308 = smul.addr %s307, 64
        %s309 = scalar_lea.vmem [#allocation3], %s308
        // Predicated region
        $region83: #{conv_subsample_forward.1} parent=81 // pred_check
          %p310 = pneg %p39
        $region84: #{conv_subsample_forward.1} parent=81 // pred_check_branch
          %312 = sbr.rel (%p310) target = $region86
        $region85: #{conv_subsample_forward.1} parent=81 // pred_region
          _
        $region86: #{conv_subsample_forward.1} parent=81 // pred_fallthru
          _
        %s313 = sand.u32 %s26, 1
        %s314 = sand.u32 %s26, 1
        %s315 = smul.addr %s314, 64
        %s316 = scalar_lea.vmem [#allocation3], %s315
        %p317 = pneg %p39
        %p318 = pneg %p36
        %p319 = pneg %p60
        %p320 = pneg %p57
        %p321 = pneg %p81
        %p322 = pneg %p78
        %p323 = pneg %p102
        %p324 = pneg %p99
        %p325 = pneg %p123
        %p326 = pneg %p120
        %p327 = pneg %p144
        %p328 = pneg %p141
        %p329 = pneg %p165
        %p330 = pneg %p162
        %p331 = pneg %p191
        %p332 = pneg %p188
        %s333 = smul.u32 4, %s18
        %p334 = scmp.lt.s32.totalorder %s333, 7
        %s335 = scalar_select %p334, %s333, 7
        %s336 = smul.addr %s335, 8
        %s337 = scalar_lea.vmem %s7, %s336
        %s338 = smul.u32 4, %s18
        %s339 = smul.u32 4, %s18
        %p340 = scmp.lt.s32.totalorder %s339, 7
        %s341 = scalar_select %p340, %s339, 7
        %s342 = smul.addr %s341, 8
        %s343 = scalar_lea.vmem %s7, %s342
        %s344 = smul.u32 4, %s18
        %v345 = vld [vmem:[%s309] sm:$0xff]
        %v346 = vld [vmem:[%s309 + $0x8] sm:$0xff]
        %v347 = vld [vmem:[%s309 + $0x10] sm:$0xff]
        %v348 = vld [vmem:[%s309 + $0x18] sm:$0xff]
        %v349 = vld [vmem:[%s1] sm:$0xff]
        %v350 = vld [vmem:[%s1 + $0x8] sm:$0xff]
        %v351 = vld [vmem:[%s1 + $0x10] sm:$0xff]
        %v352 = vld [vmem:[%s1 + $0x18] sm:$0xff]
        %v353 = vld [vmem:[%s1 + $0x20] sm:$0xff]
        %v354 = vld [vmem:[%s1 + $0x28] sm:$0xff]
        %v355 = vld [vmem:[%s1 + $0x30] sm:$0xff]
        %v356 = vld [vmem:[%s1 + $0x38] sm:$0xff]
        %v357 = vld [vmem:[%s1 + $0x40] sm:$0xff]
        %v358 = vld [vmem:[%s1 + $0x48] sm:$0xff]
        %v359 = vld [vmem:[%s1 + $0x50] sm:$0xff]
        %v360 = vld [vmem:[%s1 + $0x58] sm:$0xff]
        %v361 = vld [vmem:[%s2] sm:$0x3]
        %v363 = vperm.slane %v361, 0
        %v364 = vperm.slane %v361, 1
        %vm367 = vcmask 392192
        %v369 = vsel %vm367, %v345, 0
        %v372 = vsel %vm367, %v346, 0
        %v375 = vsel %vm367, %v347, 0
        %v378 = vsel %vm367, %v348, 0
        %380 = vmatpush.msra.mxu0 0.0
        %381 = vmatpush.msra.mxu0 0.0
        %382 = vmatpush.msra.mxu0 0.0
        %383 = vmatpush.msra.mxu0 0.0
        %384 = vmatpush.msra.mxu0 0.0
        %385 = vmatpush.msra.mxu0 0.0
        %386 = vmatpush.msra.mxu0 0.0
        %387 = vmatpush.msra.mxu0 0.0
        %388 = vmatpush.msra.mxu0 0.0
        %389 = vmatpush.msra.mxu0 0.0
        %390 = vmatpush.msra.mxu0 %v359
        %391 = vmatpush.msra.mxu0 %v357
        %392 = vmatpush.msra.mxu0 %v355
        %393 = vmatpush.msra.mxu0 %v353
        %394 = vmatpush.msra.mxu0 %v351
        %395 = vmatpush.msra.mxu0 %v349
        %396 = vmatmul.f32.gmra.mxu0 %v369
        %v397 = vpop.f32.mrf.mxu0
        %v398 = vadd.f32 %v363, %v397
        %399 = vmatmul.f32.gmra.mxu0 %v372
        %v400 = vpop.f32.mrf.mxu0
        %v401 = vadd.f32 %v363, %v400
        %402 = vmatmul.f32.gmra.mxu0 %v375
        %v403 = vpop.f32.mrf.mxu0
        %v404 = vadd.f32 %v363, %v403
        %405 = vmatmul.f32.gmra.mxu0 %v378
        %v406 = vpop.f32.mrf.mxu0
        %v407 = vadd.f32 %v363, %v406
        %408 = vdwg.mxu0
        %409 = vmatpush.msra.mxu0 0.0
        %410 = vmatpush.msra.mxu0 0.0
        %411 = vmatpush.msra.mxu0 0.0
        %412 = vmatpush.msra.mxu0 0.0
        %413 = vmatpush.msra.mxu0 0.0
        %414 = vmatpush.msra.mxu0 0.0
        %415 = vmatpush.msra.mxu0 0.0
        %416 = vmatpush.msra.mxu0 0.0
        %417 = vmatpush.msra.mxu0 0.0
        %418 = vmatpush.msra.mxu0 0.0
        %419 = vmatpush.msra.mxu0 %v360
        %420 = vmatpush.msra.mxu0 %v358
        %421 = vmatpush.msra.mxu0 %v356
        %422 = vmatpush.msra.mxu0 %v354
        %423 = vmatpush.msra.mxu0 %v352
        %424 = vmatpush.msra.mxu0 %v350
        %425 = vmatmul.f32.gmra.mxu0 %v369
        %v426 = vpop.f32.mrf.mxu0
        %v427 = vadd.f32 %v364, %v426
        %428 = vmatmul.f32.gmra.mxu0 %v372
        %v429 = vpop.f32.mrf.mxu0
        %v430 = vadd.f32 %v364, %v429
        %431 = vmatmul.f32.gmra.mxu0 %v375
        %v432 = vpop.f32.mrf.mxu0
        %v433 = vadd.f32 %v364, %v432
        %434 = vmatmul.f32.gmra.mxu0 %v378
        %v435 = vpop.f32.mrf.mxu0
        %v436 = vadd.f32 %v364, %v435
        %437 = vdwg.mxu0
        %v438 = vmax.f32 %v398, 0.0
        %v439 = vmax.f32 %v427, 0.0
        %v440 = vmax.f32 %v401, 0.0
        %v441 = vmax.f32 %v430, 0.0
        %v442 = vmax.f32 %v404, 0.0
        %v443 = vmax.f32 %v433, 0.0
        %v444 = vmax.f32 %v407, 0.0
        %v445 = vmax.f32 %v436, 0.0
        %s446 = scalar_lea.vmem %s309, 32 [#allocation3]
        %v447 = vld [vmem:[%s446] sm:$0xff]
        %v448 = vld [vmem:[%s446 + $0x8] sm:$0xff]
        %v449 = vld [vmem:[%s446 + $0x10] sm:$0xff]
        %v450 = vld [vmem:[%s446 + $0x18] sm:$0xff]
        %v452 = vsel %vm367, %v447, 0
        %v455 = vsel %vm367, %v448, 0
        %v458 = vsel %vm367, %v449, 0
        %v461 = vsel %vm367, %v450, 0
        %463 = vmatpush.msra.mxu0 0.0
        %464 = vmatpush.msra.mxu0 0.0
        %465 = vmatpush.msra.mxu0 0.0
        %466 = vmatpush.msra.mxu0 0.0
        %467 = vmatpush.msra.mxu0 0.0
        %468 = vmatpush.msra.mxu0 0.0
        %469 = vmatpush.msra.mxu0 0.0
        %470 = vmatpush.msra.mxu0 0.0
        %471 = vmatpush.msra.mxu0 0.0
        %472 = vmatpush.msra.mxu0 0.0
        %473 = vmatpush.msra.mxu0 %v359
        %474 = vmatpush.msra.mxu0 %v357
        %475 = vmatpush.msra.mxu0 %v355
        %476 = vmatpush.msra.mxu0 %v353
        %477 = vmatpush.msra.mxu0 %v351
        %478 = vmatpush.msra.mxu0 %v349
        %479 = vmatmul.f32.gmra.mxu0 %v452
        %v480 = vpop.f32.mrf.mxu0
        %v481 = vadd.f32 %v363, %v480
        %482 = vmatmul.f32.gmra.mxu0 %v455
        %v483 = vpop.f32.mrf.mxu0
        %v484 = vadd.f32 %v363, %v483
        %485 = vmatmul.f32.gmra.mxu0 %v458
        %v486 = vpop.f32.mrf.mxu0
        %v487 = vadd.f32 %v363, %v486
        %488 = vmatmul.f32.gmra.mxu0 %v461
        %v489 = vpop.f32.mrf.mxu0
        %v490 = vadd.f32 %v363, %v489
        %491 = vdwg.mxu0
        %492 = vmatpush.msra.mxu0 0.0
        %493 = vmatpush.msra.mxu0 0.0
        %494 = vmatpush.msra.mxu0 0.0
        %495 = vmatpush.msra.mxu0 0.0
        %496 = vmatpush.msra.mxu0 0.0
        %497 = vmatpush.msra.mxu0 0.0
        %498 = vmatpush.msra.mxu0 0.0
        %499 = vmatpush.msra.mxu0 0.0
        %500 = vmatpush.msra.mxu0 0.0
        %501 = vmatpush.msra.mxu0 0.0
        %502 = vmatpush.msra.mxu0 %v360
        %503 = vmatpush.msra.mxu0 %v358
        %504 = vmatpush.msra.mxu0 %v356
        %505 = vmatpush.msra.mxu0 %v354
        %506 = vmatpush.msra.mxu0 %v352
        %507 = vmatpush.msra.mxu0 %v350
        %508 = vmatmul.f32.gmra.mxu0 %v452
        %v509 = vpop.f32.mrf.mxu0
        %v510 = vadd.f32 %v364, %v509
        %511 = vmatmul.f32.gmra.mxu0 %v455
        %v512 = vpop.f32.mrf.mxu0
        %v513 = vadd.f32 %v364, %v512
        %514 = vmatmul.f32.gmra.mxu0 %v458
        %v515 = vpop.f32.mrf.mxu0
        %v516 = vadd.f32 %v364, %v515
        %517 = vmatmul.f32.gmra.mxu0 %v461
        %v518 = vpop.f32.mrf.mxu0
        %v519 = vadd.f32 %v364, %v518
        %520 = vdwg.mxu0
        %v521 = vmax.f32 %v481, 0.0
        %v522 = vmax.f32 %v510, 0.0
        %v523 = vmax.f32 %v484, 0.0
        %v524 = vmax.f32 %v513, 0.0
        %v525 = vmax.f32 %v487, 0.0
        %v526 = vmax.f32 %v516, 0.0
        %v527 = vmax.f32 %v490, 0.0
        %v528 = vmax.f32 %v519, 0.0
        %529 = vst [vmem:[#allocation2] sm:$0xff] %v438
        %vm530 = vcmask 785408
        %531 = vst.msk [vmem:[#allocation2 + $0x8] sm:$0xff] %vm530, %v439
        %532 = vst [vmem:[#allocation2 + $0x10] sm:$0xff] %v440
        %533 = vst.msk [vmem:[#allocation2 + $0x18] sm:$0xff] %vm530, %v441
        %534 = vst [vmem:[#allocation2 + $0x20] sm:$0xff] %v442
        %535 = vst.msk [vmem:[#allocation2 + $0x28] sm:$0xff] %vm530, %v443
        %536 = vst [vmem:[#allocation2 + $0x30] sm:$0xff] %v444
        %537 = vst.msk [vmem:[#allocation2 + $0x38] sm:$0xff] %vm530, %v445
        %538 = vst [vmem:[#allocation2 + $0x40] sm:$0xff] 0.0
        %539 = vst.msk [vmem:[#allocation2 + $0x48] sm:$0xff] %vm530, 0.0
        %v540 = vld [vmem:[#allocation2] sm:$0xfe]
        %v541 = vld [vmem:[#allocation2 + $0x8] sm:$0xfe]
        %v542 = vld [vmem:[#allocation2 + $0x10] sm:$0xff]
        %v543 = vld [vmem:[#allocation2 + $0x18] sm:$0xff]
        %v544 = vld [vmem:[#allocation2 + $0x20] sm:$0xff]
        %v545 = vld [vmem:[#allocation2 + $0x28] sm:$0xff]
        %v546 = vld [vmem:[#allocation2 + $0x30] sm:$0xff]
        %v547 = vld [vmem:[#allocation2 + $0x38] sm:$0xff]
        %v548 = vld [vmem:[#allocation2 + $0x40] sm:$0x1]
        %v549 = vld [vmem:[#allocation2 + $0x48] sm:$0x1]
        %v550 = vld [vmem:[%s3] sm:$0xff]
        %v551 = vld [vmem:[%s3 + $0x8] sm:$0xff]
        %v552 = vld [vmem:[%s3 + $0x10] sm:$0xff]
        %v553 = vld [vmem:[%s3 + $0x18] sm:$0xff]
        %v554 = vld [vmem:[%s3 + $0x20] sm:$0xff]
        %v555 = vld [vmem:[%s3 + $0x28] sm:$0xff]
        %v556 = vld [vmem:[%s3 + $0x30] sm:$0xff]
        %v557 = vld [vmem:[%s3 + $0x38] sm:$0xff]
        %v558 = vld [vmem:[%s3 + $0x40] sm:$0xff]
        %v559 = vld [vmem:[%s3 + $0x48] sm:$0xff]
        %v560 = vld [vmem:[%s3 + $0x50] sm:$0xff]
        %v561 = vld [vmem:[%s3 + $0x58] sm:$0xff]
        %v562 = vld [vmem:[%s3 + $0x60] sm:$0xff]
        %v563 = vld [vmem:[%s3 + $0x68] sm:$0xff]
        %v564 = vld [vmem:[%s3 + $0x70] sm:$0xff]
        %v565 = vld [vmem:[%s3 + $0x78] sm:$0xff]
        %v566 = vld [vmem:[%s3 + $0x80] sm:$0xff]
        %v567 = vld [vmem:[%s3 + $0x88] sm:$0xff]
        %v568 = vld [vmem:[%s3 + $0x90] sm:$0xff]
        %v569 = vld [vmem:[%s3 + $0x98] sm:$0xff]
        %v570 = vld [vmem:[%s3 + $0xa0] sm:$0xff]
        %v571 = vld [vmem:[%s3 + $0xa8] sm:$0xff]
        %v572 = vld [vmem:[%s3 + $0xb0] sm:$0xff]
        %v573 = vld [vmem:[%s3 + $0xb8] sm:$0xff]
        %v574 = vld [vmem:[%s3 + $0xc0] sm:$0xff]
        %v575 = vld [vmem:[%s3 + $0xc8] sm:$0xff]
        %v576 = vld [vmem:[%s3 + $0xd0] sm:$0xff]
        %v577 = vld [vmem:[%s3 + $0xd8] sm:$0xff]
        %s578 = scalar_lea.vmem %s3, 224
        %v579 = vld [vmem:[%s578] sm:$0xff]
        %v580 = vld [vmem:[%s578 + $0x8] sm:$0xff]
        %v581 = vld [vmem:[%s578 + $0x10] sm:$0xff]
        %v582 = vld [vmem:[%s578 + $0x18] sm:$0xff]
        %v583 = vld [vmem:[%s578 + $0x20] sm:$0xff]
        %v584 = vld [vmem:[%s578 + $0x28] sm:$0xff]
        %v585 = vld [vmem:[%s578 + $0x30] sm:$0xff]
        %v586 = vld [vmem:[%s578 + $0x38] sm:$0xff]
        %v587 = vld [vmem:[%s578 + $0x40] sm:$0xff]
        %v588 = vld [vmem:[%s578 + $0x48] sm:$0xff]
        %v589 = vld [vmem:[%s578 + $0x50] sm:$0xff]
        %v590 = vld [vmem:[%s578 + $0x58] sm:$0xff]
        %v591 = vld [vmem:[%s578 + $0x60] sm:$0xff]
        %v592 = vld [vmem:[%s578 + $0x68] sm:$0xff]
        %v593 = vld [vmem:[%s578 + $0x70] sm:$0xff]
        %v594 = vld [vmem:[%s578 + $0x78] sm:$0xff]
        %v595 = vld [vmem:[%s578 + $0x80] sm:$0xff]
        %v596 = vld [vmem:[%s578 + $0x88] sm:$0xff]
        %v597 = vld [vmem:[%s578 + $0x90] sm:$0xff]
        %v598 = vld [vmem:[%s578 + $0x98] sm:$0xff]
        %v599 = vld [vmem:[%s578 + $0xa0] sm:$0xff]
        %v600 = vld [vmem:[%s578 + $0xa8] sm:$0xff]
        %v601 = vld [vmem:[%s578 + $0xb0] sm:$0xff]
        %v602 = vld [vmem:[%s578 + $0xb8] sm:$0xff]
        %v603 = vld [vmem:[%s578 + $0xc0] sm:$0xff]
        %v604 = vld [vmem:[%s578 + $0xc8] sm:$0xff]
        %v605 = vld [vmem:[%s578 + $0xd0] sm:$0xff]
        %v606 = vld [vmem:[%s578 + $0xd8] sm:$0xff]
        %v608 = vsel %vm530, %v522, 0
        %v611 = vsel %vm530, %v524, 0
        %v614 = vsel %vm530, %v526, 0
        %v617 = vsel %vm530, %v528, 0
        %619 = vmatpush.msra.mxu0 %v594
        %620 = vmatpush.msra.mxu0 %v593
        %621 = vmatpush.msra.mxu0 %v592
        %622 = vmatpush.msra.mxu0 %v591
        %623 = vmatpush.msra.mxu0 %v590
        %624 = vmatpush.msra.mxu0 %v589
        %625 = vmatpush.msra.mxu0 %v588
        %626 = vmatpush.msra.mxu0 %v587
        %627 = vmatpush.msra.mxu0 %v586
        %628 = vmatpush.msra.mxu0 %v585
        %629 = vmatpush.msra.mxu0 %v584
        %630 = vmatpush.msra.mxu0 %v583
        %631 = vmatpush.msra.mxu0 %v582
        %632 = vmatpush.msra.mxu0 %v581
        %633 = vmatpush.msra.mxu0 %v580
        %634 = vmatpush.msra.mxu0 %v579
        %635 = vmatmul.f32.gmra.mxu0 %v521
        %v636 = vpop.f32.mrf.mxu0
        %v637 = vadd.f32 0.0, %v636
        %638 = vmatmul.f32.gmra.mxu0 %v523
        %v639 = vpop.f32.mrf.mxu0
        %v640 = vadd.f32 0.0, %v639
        %641 = vmatmul.f32.gmra.mxu0 %v525
        %v642 = vpop.f32.mrf.mxu0
        %v643 = vadd.f32 0.0, %v642
        %644 = vmatmul.f32.gmra.mxu0 %v527
        %v645 = vpop.f32.mrf.mxu0
        %v646 = vadd.f32 0.0, %v645
        %647 = vdwg.mxu0
        %648 = vmatpush.msra.mxu0 0.0
        %649 = vmatpush.msra.mxu0 0.0
        %650 = vmatpush.msra.mxu0 0.0
        %651 = vmatpush.msra.mxu0 0.0
        %652 = vmatpush.msra.mxu0 %v606
        %653 = vmatpush.msra.mxu0 %v605
        %654 = vmatpush.msra.mxu0 %v604
        %655 = vmatpush.msra.mxu0 %v603
        %656 = vmatpush.msra.mxu0 %v602
        %657 = vmatpush.msra.mxu0 %v601
        %658 = vmatpush.msra.mxu0 %v600
        %659 = vmatpush.msra.mxu0 %v599
        %660 = vmatpush.msra.mxu0 %v598
        %661 = vmatpush.msra.mxu0 %v597
        %662 = vmatpush.msra.mxu0 %v596
        %663 = vmatpush.msra.mxu0 %v595
        %664 = vmatmul.f32.gmra.mxu0 %v608
        %v665 = vpop.f32.mrf.mxu0
        %v666 = vadd.f32 %v637, %v665
        %667 = vmatmul.f32.gmra.mxu0 %v611
        %v668 = vpop.f32.mrf.mxu0
        %v669 = vadd.f32 %v640, %v668
        %670 = vmatmul.f32.gmra.mxu0 %v614
        %v671 = vpop.f32.mrf.mxu0
        %v672 = vadd.f32 %v643, %v671
        %673 = vmatmul.f32.gmra.mxu0 %v617
        %v674 = vpop.f32.mrf.mxu0
        %v675 = vadd.f32 %v646, %v674
        %676 = vdwg.mxu0
        %v678 = vsel %vm530, %v439, 0
        %v681 = vsel %vm530, %v441, 0
        %v684 = vsel %vm530, %v443, 0
        %v687 = vsel %vm530, %v445, 0
        %689 = vmatpush.msra.mxu0 %v565
        %690 = vmatpush.msra.mxu0 %v564
        %691 = vmatpush.msra.mxu0 %v563
        %692 = vmatpush.msra.mxu0 %v562
        %693 = vmatpush.msra.mxu0 %v561
        %694 = vmatpush.msra.mxu0 %v560
        %695 = vmatpush.msra.mxu0 %v559
        %696 = vmatpush.msra.mxu0 %v558
        %697 = vmatpush.msra.mxu0 %v557
        %698 = vmatpush.msra.mxu0 %v556
        %699 = vmatpush.msra.mxu0 %v555
        %700 = vmatpush.msra.mxu0 %v554
        %701 = vmatpush.msra.mxu0 %v553
        %702 = vmatpush.msra.mxu0 %v552
        %703 = vmatpush.msra.mxu0 %v551
        %704 = vmatpush.msra.mxu0 %v550
        %705 = vmatmul.f32.gmra.mxu0 %v438
        %v706 = vpop.f32.mrf.mxu0
        %v707 = vadd.f32 %v666, %v706
        %708 = vmatmul.f32.gmra.mxu0 %v440
        %v709 = vpop.f32.mrf.mxu0
        %v710 = vadd.f32 %v669, %v709
        %711 = vmatmul.f32.gmra.mxu0 %v442
        %v712 = vpop.f32.mrf.mxu0
        %v713 = vadd.f32 %v672, %v712
        %714 = vmatmul.f32.gmra.mxu0 %v444
        %v715 = vpop.f32.mrf.mxu0
        %v716 = vadd.f32 %v675, %v715
        %717 = vdwg.mxu0
        %718 = vmatpush.msra.mxu0 0.0
        %719 = vmatpush.msra.mxu0 0.0
        %720 = vmatpush.msra.mxu0 0.0
        %721 = vmatpush.msra.mxu0 0.0
        %722 = vmatpush.msra.mxu0 %v577
        %723 = vmatpush.msra.mxu0 %v576
        %724 = vmatpush.msra.mxu0 %v575
        %725 = vmatpush.msra.mxu0 %v574
        %726 = vmatpush.msra.mxu0 %v573
        %727 = vmatpush.msra.mxu0 %v572
        %728 = vmatpush.msra.mxu0 %v571
        %729 = vmatpush.msra.mxu0 %v570
        %730 = vmatpush.msra.mxu0 %v569
        %731 = vmatpush.msra.mxu0 %v568
        %732 = vmatpush.msra.mxu0 %v567
        %733 = vmatpush.msra.mxu0 %v566
        %734 = vmatmul.f32.gmra.mxu0 %v678
        %v735 = vpop.f32.mrf.mxu0
        %v736 = vadd.f32 %v707, %v735
        %737 = vmatmul.f32.gmra.mxu0 %v681
        %v738 = vpop.f32.mrf.mxu0
        %v739 = vadd.f32 %v710, %v738
        %740 = vmatmul.f32.gmra.mxu0 %v684
        %v741 = vpop.f32.mrf.mxu0
        %v742 = vadd.f32 %v713, %v741
        %743 = vmatmul.f32.gmra.mxu0 %v687
        %v744 = vpop.f32.mrf.mxu0
        %v745 = vadd.f32 %v716, %v744
        %746 = vdwg.mxu0
        %s747 = scalar_lea.vmem %s3, 448
        %v748 = vld [vmem:[%s747] sm:$0xff]
        %v749 = vld [vmem:[%s747 + $0x8] sm:$0xff]
        %v750 = vld [vmem:[%s747 + $0x10] sm:$0xff]
        %v751 = vld [vmem:[%s747 + $0x18] sm:$0xff]
        %v752 = vld [vmem:[%s747 + $0x20] sm:$0xff]
        %v753 = vld [vmem:[%s747 + $0x28] sm:$0xff]
        %v754 = vld [vmem:[%s747 + $0x30] sm:$0xff]
        %v755 = vld [vmem:[%s747 + $0x38] sm:$0xff]
        %v756 = vld [vmem:[%s747 + $0x40] sm:$0xff]
        %v757 = vld [vmem:[%s747 + $0x48] sm:$0xff]
        %v758 = vld [vmem:[%s747 + $0x50] sm:$0xff]
        %v759 = vld [vmem:[%s747 + $0x58] sm:$0xff]
        %v760 = vld [vmem:[%s747 + $0x60] sm:$0xff]
        %v761 = vld [vmem:[%s747 + $0x68] sm:$0xff]
        %v762 = vld [vmem:[%s747 + $0x70] sm:$0xff]
        %v763 = vld [vmem:[%s747 + $0x78] sm:$0xff]
        %v764 = vld [vmem:[%s747 + $0x80] sm:$0xff]
        %v765 = vld [vmem:[%s747 + $0x88] sm:$0xff]
        %v766 = vld [vmem:[%s747 + $0x90] sm:$0xff]
        %v767 = vld [vmem:[%s747 + $0x98] sm:$0xff]
        %v768 = vld [vmem:[%s747 + $0xa0] sm:$0xff]
        %v769 = vld [vmem:[%s747 + $0xa8] sm:$0xff]
        %v770 = vld [vmem:[%s747 + $0xb0] sm:$0xff]
        %v771 = vld [vmem:[%s747 + $0xb8] sm:$0xff]
        %v772 = vld [vmem:[%s747 + $0xc0] sm:$0xff]
        %v773 = vld [vmem:[%s747 + $0xc8] sm:$0xff]
        %v774 = vld [vmem:[%s747 + $0xd0] sm:$0xff]
        %v775 = vld [vmem:[%s747 + $0xd8] sm:$0xff]
        %vm786 = vcmask 1046528
        %v787 = vrot.slane %v540, 1
        %v788 = vrot.slane %v542, 1
        %v789 = vsel %vm786, %v787, %v788
        %v790 = vrot.slane %v541, 1
        %v791 = vrot.slane %v543, 1
        %v792 = vsel %vm786, %v790, %v791
        %v793 = vrot.slane %v544, 1
        %v794 = vsel %vm786, %v788, %v793
        %v795 = vrot.slane %v545, 1
        %v796 = vsel %vm786, %v791, %v795
        %v797 = vrot.slane %v546, 1
        %v798 = vsel %vm786, %v793, %v797
        %v799 = vrot.slane %v547, 1
        %v800 = vsel %vm786, %v795, %v799
        %v801 = vrot.slane %v548, 1
        %v802 = vsel %vm786, %v797, %v801
        %v803 = vrot.slane %v549, 1
        %v804 = vsel %vm786, %v799, %v803
        %v809 = vsel %vm530, %v792, 0
        %v811 = vsel %vm530, %v796, 0
        %v813 = vsel %vm530, %v800, 0
        %v815 = vsel %vm530, %v804, 0
        %817 = vmatpush.msra.mxu0 %v763
        %818 = vmatpush.msra.mxu0 %v762
        %819 = vmatpush.msra.mxu0 %v761
        %820 = vmatpush.msra.mxu0 %v760
        %821 = vmatpush.msra.mxu0 %v759
        %822 = vmatpush.msra.mxu0 %v758
        %823 = vmatpush.msra.mxu0 %v757
        %824 = vmatpush.msra.mxu0 %v756
        %825 = vmatpush.msra.mxu0 %v755
        %826 = vmatpush.msra.mxu0 %v754
        %827 = vmatpush.msra.mxu0 %v753
        %828 = vmatpush.msra.mxu0 %v752
        %829 = vmatpush.msra.mxu0 %v751
        %830 = vmatpush.msra.mxu0 %v750
        %831 = vmatpush.msra.mxu0 %v749
        %832 = vmatpush.msra.mxu0 %v748
        %833 = vmatmul.f32.gmra.mxu0 %v789
        %v834 = vpop.f32.mrf.mxu0
        %v835 = vadd.f32 0.0, %v834
        %836 = vmatmul.f32.gmra.mxu0 %v794
        %v837 = vpop.f32.mrf.mxu0
        %v838 = vadd.f32 0.0, %v837
        %839 = vmatmul.f32.gmra.mxu0 %v798
        %v840 = vpop.f32.mrf.mxu0
        %v841 = vadd.f32 0.0, %v840
        %842 = vmatmul.f32.gmra.mxu0 %v802
        %v843 = vpop.f32.mrf.mxu0
        %v844 = vadd.f32 0.0, %v843
        %845 = vdwg.mxu0
        %846 = vmatpush.msra.mxu0 0.0
        %847 = vmatpush.msra.mxu0 0.0
        %848 = vmatpush.msra.mxu0 0.0
        %849 = vmatpush.msra.mxu0 0.0
        %850 = vmatpush.msra.mxu0 %v775
        %851 = vmatpush.msra.mxu0 %v774
        %852 = vmatpush.msra.mxu0 %v773
        %853 = vmatpush.msra.mxu0 %v772
        %854 = vmatpush.msra.mxu0 %v771
        %855 = vmatpush.msra.mxu0 %v770
        %856 = vmatpush.msra.mxu0 %v769
        %857 = vmatpush.msra.mxu0 %v768
        %858 = vmatpush.msra.mxu0 %v767
        %859 = vmatpush.msra.mxu0 %v766
        %860 = vmatpush.msra.mxu0 %v765
        %861 = vmatpush.msra.mxu0 %v764
        %862 = vmatmul.f32.gmra.mxu0 %v809
        %v863 = vpop.f32.mrf.mxu0
        %v864 = vadd.f32 %v835, %v863
        %865 = vmatmul.f32.gmra.mxu0 %v811
        %v866 = vpop.f32.mrf.mxu0
        %v867 = vadd.f32 %v838, %v866
        %868 = vmatmul.f32.gmra.mxu0 %v813
        %v869 = vpop.f32.mrf.mxu0
        %v870 = vadd.f32 %v841, %v869
        %871 = vmatmul.f32.gmra.mxu0 %v815
        %v872 = vpop.f32.mrf.mxu0
        %v873 = vadd.f32 %v844, %v872
        %874 = vdwg.mxu0
        %v875 = vadd.f32 %v736, %v864
        %v876 = vadd.f32 %v739, %v867
        %v877 = vadd.f32 %v742, %v870
        %v878 = vadd.f32 %v745, %v873
        %v879 = vld [vmem:[%s4] sm:$0x1]
        %v881 = vperm.slane %v879, 0
        %v883 = vadd.f32 %v875, %v881
        %v884 = vadd.f32 %v876, %v881
        %v885 = vadd.f32 %v877, %v881
        %v886 = vadd.f32 %v878, %v881
        %v887 = vmax.f32 %v883, 0.0
        %v888 = vmax.f32 %v884, 0.0
        %v889 = vmax.f32 %v885, 0.0
        %v890 = vmax.f32 %v886, 0.0
        %v891 = vld [vmem:[%s5] sm:$0xff]
        %v892 = vld [vmem:[%s5 + $0x8] sm:$0xff]
        %v893 = vld [vmem:[%s5 + $0x10] sm:$0xff]
        %v894 = vld [vmem:[%s5 + $0x18] sm:$0xff]
        %v895 = vld [vmem:[%s5 + $0x20] sm:$0xff]
        %v896 = vld [vmem:[%s5 + $0x28] sm:$0xff]
        %v897 = vld [vmem:[%s5 + $0x30] sm:$0xff]
        %v898 = vld [vmem:[%s5 + $0x38] sm:$0xff]
        %v899 = vld [vmem:[%s5 + $0x40] sm:$0xff]
        %v900 = vld [vmem:[%s5 + $0x48] sm:$0xff]
        %v901 = vld [vmem:[%s5 + $0x50] sm:$0xff]
        %v902 = vld [vmem:[%s5 + $0x58] sm:$0xff]
        %v903 = vld [vmem:[%s6] sm:$0x1]
        %v905 = vperm.slane %v903, 0
        %v908 = vsel %vm530, %v887, 0
        %v911 = vsel %vm530, %v888, 0
        %v914 = vsel %vm530, %v889, 0
        %v917 = vsel %vm530, %v890, 0
        %919 = vmatpush.msra.mxu0 0.0
        %920 = vmatpush.msra.mxu0 0.0
        %921 = vmatpush.msra.mxu0 0.0
        %922 = vmatpush.msra.mxu0 0.0
        %923 = vmatpush.msra.mxu0 %v902
        %924 = vmatpush.msra.mxu0 %v901
        %925 = vmatpush.msra.mxu0 %v900
        %926 = vmatpush.msra.mxu0 %v899
        %927 = vmatpush.msra.mxu0 %v898
        %928 = vmatpush.msra.mxu0 %v897
        %929 = vmatpush.msra.mxu0 %v896
        %930 = vmatpush.msra.mxu0 %v895
        %931 = vmatpush.msra.mxu0 %v894
        %932 = vmatpush.msra.mxu0 %v893
        %933 = vmatpush.msra.mxu0 %v892
        %934 = vmatpush.msra.mxu0 %v891
        %935 = vmatmul.f32.gmra.mxu0 %v908
        %v936 = vpop.f32.mrf.mxu0
        %v937 = vadd.f32 %v905, %v936
        %938 = vmatmul.f32.gmra.mxu0 %v911
        %v939 = vpop.f32.mrf.mxu0
        %v940 = vadd.f32 %v905, %v939
        %941 = vmatmul.f32.gmra.mxu0 %v914
        %v942 = vpop.f32.mrf.mxu0
        %v943 = vadd.f32 %v905, %v942
        %944 = vmatmul.f32.gmra.mxu0 %v917
        %v945 = vpop.f32.mrf.mxu0
        %v946 = vadd.f32 %v905, %v945
        %947 = vdwg.mxu0
        %948 = vst [vmem:[%s343] sm:$0xff] %v937
        %949 = vst [vmem:[%s343 + $0x8] sm:$0xff] %v940
        %950 = vst [vmem:[%s343 + $0x10] sm:$0xff] %v943
        %951 = vst [vmem:[%s343 + $0x18] sm:$0xff] %v946
        %s952 = smul.u32 4, %s18
        %p953 = scmp.lt.s32.totalorder %s952, 7
        %s954 = scalar_select %p953, %s952, 7
        %s955 = smul.addr %s954, 8
        %s956 = scalar_lea.vmem %s7, %s955
        // Predicated region
        $region87: #{conv_subsample_forward.1} parent=81 // pred_check
          %p957 = pneg %p188
        $region88: #{conv_subsample_forward.1} parent=81 // pred_check_branch
          %959 = sbr.rel (%p957) target = $region90
        $region89: #{conv_subsample_forward.1} parent=81 // pred_region
          %s960 = smul.u32 4, %s18
        $region90: #{conv_subsample_forward.1} parent=81 // pred_fallthru
          _
      $region82: #{conv_subsample_forward.1} parent=5 // pred_fallthru
        _
      %p961 = scmp.le.s32.totalorder 2, %s13
      // Predicated region
      $region91: #{conv_subsample_forward.1} parent=5 // pred_check
        %p962 = pneg %p961
      $region92: #{conv_subsample_forward.1} parent=5 // pred_check_branch
        %964 = sbr.rel (%p962) target = $region94
      $region93: #{conv_subsample_forward.1} parent=5 // pred_region
        %s965 = ssub.s32 %s13, 2
        // Predicated region
        $region95: #{conv_subsample_forward.1} parent=93 // pred_check
          %p966 = pneg %p194
        $region96: #{conv_subsample_forward.1} parent=93 // pred_check_branch
          %968 = sbr.rel (%p966) target = $region98
        $region97: #{conv_subsample_forward.1} parent=93 // pred_region
          %s969 = smul.u32 4, %s19
          %p970 = scmp.lt.s32.totalorder %s969, 7
          %s971 = scalar_select %p970, %s969, 7
          %s972 = smul.addr %s971, 8
          %s973 = scalar_lea.vmem %s7, %s972
        $region98: #{conv_subsample_forward.1} parent=93 // pred_fallthru
          _
      $region94: #{conv_subsample_forward.1} parent=5 // pred_fallthru
        _
    $region6: #{conv_subsample_forward.1} parent=1 // loop_footer
      %s17 = sadd.s32 1, %s13
    $region7: #{conv_subsample_forward.1} parent=1 // loop_footer_branch
      %12 = sbr.rel target = $region3
    $region8: #{conv_subsample_forward.1} parent=1 // loop_exit
      _

</llo_original>
